<compile_context>
chip_gen: v7x
topology: tpu7x:2x2x1
jax: 0.10.0
libtpu: 0.0.40
codegen_flags: <defaults>
</compile_context>

<pallas_src>
import functools
import math

import jax
import jax.numpy as jnp
from jax import lax
from jax.experimental import pallas as pl
from jax.experimental.pallas import tpu as pltpu

_EPS_GN = 1e-5                # nn.GroupNorm default eps
_LANE = 128                   # TPU lane width
_SUB = 16                     # row quantum for bf16 blocks ((16,128) packing)
_HALO = 16                    # super-row halo block for K > stride layers
_TT_MAX = 512                 # max output-time rows per tile
_VMEM_LIMIT = 32 * 1024 * 1024


def _round_up(x, m):
    return (x + m - 1) // m * m


def _cdiv(a, b):
    return -(-a // b)


# ---------------------------------------------------------------------------
# In-kernel math helpers (f32)
# ---------------------------------------------------------------------------

def _erf_pos(z):
    """Abramowitz & Stegun 7.1.26 erf for z >= 0 (max abs err ~1.5e-7)."""
    p = 0.3275911
    a1, a2, a3, a4, a5 = (0.254829592, -0.284496736, 1.421413741,
                          -1.453152027, 1.061405429)
    t = 1.0 / (1.0 + p * z)
    poly = ((((a5 * t + a4) * t + a3) * t + a2) * t + a1) * t
    return 1.0 - poly * jnp.exp(-z * z)


def _gelu_exact(x):
    # GELU(x) = 0.5*(x + |x|*erf(|x|/sqrt(2)))  (erf is odd); exp stays on the EUP slot.
    ax = jnp.abs(x)
    return 0.5 * (x + ax * _erf_pos(ax * (1.0 / math.sqrt(2.0))))


# ---------------------------------------------------------------------------
# Layer 0 (Cin == 1): MXU conv + two-pass GroupNorm(dim, dim) + GELU
# ---------------------------------------------------------------------------

def _l0_stats_kernel(xt_ref, w_ref, s_ref, q_ref):
    # xt_ref: (Tt0, K0) bf16 waveform taps (rows beyond the valid range are zeroed)
    # w_ref : (K0, Cp)  bf16 per-tap weight rows
    # s_ref/q_ref: (1, Cp) f32 per-(batch, channel) sum / sum-of-squares accumulators
    @pl.when(pl.program_id(1) == 0)
    def _():
        s_ref[...] = jnp.zeros_like(s_ref)
        q_ref[...] = jnp.zeros_like(q_ref)

    y = jnp.dot(xt_ref[...], w_ref[...], preferred_element_type=jnp.float32)
    s_ref[...] += jnp.sum(y, axis=0, keepdims=True)
    q_ref[...] += jnp.sum(y * y, axis=0, keepdims=True)


def _l0_stats_call(x_taps, w0, *, tt, n_t):
    b, _, k0 = x_taps.shape
    cp = w0.shape[1]
    return pl.pallas_call(
        _l0_stats_kernel,
        out_shape=(jax.ShapeDtypeStruct((b, 1, cp), jnp.float32),
                   jax.ShapeDtypeStruct((b, 1, cp), jnp.float32)),
        grid=(b, n_t),
        in_specs=[
            pl.BlockSpec((None, tt, k0), lambda bi, ti: (bi, ti, 0)),
            pl.BlockSpec((k0, cp), lambda bi, ti: (0, 0)),
        ],
        out_specs=(pl.BlockSpec((None, 1, cp), lambda bi, ti: (bi, 0, 0)),
                   pl.BlockSpec((None, 1, cp), lambda bi, ti: (bi, 0, 0))),
        compiler_params=pltpu.CompilerParams(
            dimension_semantics=("parallel", "arbitrary"),
            vmem_limit_bytes=_VMEM_LIMIT),
    )(x_taps, w0)


def _l0_norm_kernel(xt_ref, w_ref, sc_ref, sh_ref, o_ref):
    # Recompute the cheap (K0-deep) conv, apply folded GroupNorm scale/shift, GELU, store bf16.
    y = jnp.dot(xt_ref[...], w_ref[...], preferred_element_type=jnp.float32)
    y = y * sc_ref[...] + sh_ref[...]
    o_ref[...] = _gelu_exact(y).astype(o_ref.dtype)


def _l0_norm_call(x_taps, w0, scale, shift, *, tt, n_t):
    b, t0a, k0 = x_taps.shape
    cp = w0.shape[1]
    return pl.pallas_call(
        _l0_norm_kernel,
        out_shape=jax.ShapeDtypeStruct((b, t0a, cp), jnp.bfloat16),
        grid=(n_t, b),
        in_specs=[
            pl.BlockSpec((None, tt, k0), lambda ti, bi: (bi, ti, 0)),
            pl.BlockSpec((k0, cp), lambda ti, bi: (0, 0)),
            pl.BlockSpec((None, 1, cp), lambda ti, bi: (bi, 0, 0)),
            pl.BlockSpec((None, 1, cp), lambda ti, bi: (bi, 0, 0)),
        ],
        out_specs=pl.BlockSpec((None, tt, cp), lambda ti, bi: (bi, ti, 0)),
        compiler_params=pltpu.CompilerParams(
            dimension_semantics=("parallel", "parallel"),
            vmem_limit_bytes=_VMEM_LIMIT),
    )(x_taps, w0, scale, shift)


# ---------------------------------------------------------------------------
# Layers >= 1: super-row packed conv = G contiguous bf16 matmuls (f32 accum) + GELU
# ---------------------------------------------------------------------------

def _conv_g1_kernel(x_ref, w_ref, o_ref):
    # K <= stride: one matmul per tile, no halo, no scratch, acc init from the dot itself.
    y = jnp.dot(x_ref[...], w_ref[0], preferred_element_type=jnp.float32)
    o_ref[...] = _gelu_exact(y).astype(o_ref.dtype)


def _conv_gk_kernel(x_ref, hx_ref, w_ref, o_ref, acc_ref, *, G, Tt):
    # x_ref : (Tt, S*Cin_p)     bf16  main super-rows of this tile
    # hx_ref: (_HALO, S*Cin_p)  bf16  first super-rows of the next tile (rows < G-1 used)
    # w_ref : (G, S*Cin_p, Cout_p) bf16 per-tap-group weights
    # acc_ref: (Tt, Cout_p) f32 scratch accumulator
    xv = x_ref[...]
    acc_ref[...] = jnp.dot(xv, w_ref[0], preferred_element_type=jnp.float32)
    for g in range(1, G):
        acc_ref[0:Tt - g, :] += jnp.dot(
            xv[g:, :], w_ref[g], preferred_element_type=jnp.float32)
        acc_ref[Tt - g:Tt, :] += jnp.dot(
            hx_ref[0:g, :], w_ref[g], preferred_element_type=jnp.float32)
    o_ref[...] = _gelu_exact(acc_ref[...]).astype(o_ref.dtype)


def _conv_layer_call(x_sr, w_g, *, G, Tt, n_t):
    # x_sr: (B, R, S*Cin_p) bf16 super-row view; w_g: (G, S*Cin_p, Cout_p) bf16
    b, r, sc = x_sr.shape
    cout_p = w_g.shape[-1]
    out_shape = jax.ShapeDtypeStruct((b, n_t * Tt, cout_p), jnp.bfloat16)
    out_spec = pl.BlockSpec((None, Tt, cout_p), lambda ti, bi: (bi, ti, 0))
    # TODO(synk): on v7x, mark the constant-index weight BlockSpec pipeline_mode=pl.Buffered(1)
    # to reclaim its second VMEM buffer (not needed for this tile budget, left double-buffered).
    if G == 1:
        return pl.pallas_call(
            _conv_g1_kernel,
            out_shape=out_shape,
            grid=(n_t, b),
            in_specs=[
                pl.BlockSpec((None, Tt, sc), lambda ti, bi: (bi, ti, 0)),
                pl.BlockSpec((G, sc, cout_p), lambda ti, bi: (0, 0, 0)),
            ],
            out_specs=out_spec,
            compiler_params=pltpu.CompilerParams(
                dimension_semantics=("parallel", "parallel"),
                vmem_limit_bytes=_VMEM_LIMIT),
        )(x_sr, w_g)

    assert Tt % _HALO == 0 and G - 1 <= _HALO
    assert r >= n_t * Tt + _HALO, (r, n_t, Tt)
    hblocks = Tt // _HALO
    kernel = functools.partial(_conv_gk_kernel, G=G, Tt=Tt)
    return pl.pallas_call(
        kernel,
        out_shape=out_shape,
        grid=(n_t, b),
        in_specs=[
            pl.BlockSpec((None, Tt, sc), lambda ti, bi: (bi, ti, 0)),
            pl.BlockSpec((None, _HALO, sc), lambda ti, bi: (bi, (ti + 1) * hblocks, 0)),
            pl.BlockSpec((G, sc, cout_p), lambda ti, bi: (0, 0, 0)),
        ],
        out_specs=out_spec,
        scratch_shapes=[pltpu.VMEM((Tt, cout_p), jnp.float32)],
        compiler_params=pltpu.CompilerParams(
            dimension_semantics=("parallel", "parallel"),
            vmem_limit_bytes=_VMEM_LIMIT),
    )(x_sr, x_sr, w_g)


# ---------------------------------------------------------------------------
# Model wrapper
# ---------------------------------------------------------------------------

class ConvFeatureExtractionModel:
    """JAX/Pallas port of the PyTorch ConvFeatureExtractionModel (conv_bias=False, dropout=0)."""

    def __init__(self, conv_layers, key):
        self.conv_layers = list(conv_layers)
        self.params = []   # f32 params in PyTorch layout, used by the reference
        in_d = 1
        for i, (dim, k, stride) in enumerate(self.conv_layers):
            key, wk = jax.random.split(key)
            fan_in = in_d * k
            w = jax.random.normal(wk, (dim, in_d, k), jnp.float32) * math.sqrt(2.0 / fan_in)
            gamma = jnp.ones((dim,), jnp.float32)   # GroupNorm affine defaults
            beta = jnp.zeros((dim,), jnp.float32)
            self.params.append((w, gamma, beta, stride, i == 0))
            in_d = dim

        # Kernel-side packed weights: bf16, channel-padded to 128 lanes, tap-grouped so each
        # conv is ceil(K/stride) matmuls with contraction stride*Cin_p.
        # NOTE: 128-lane padding is wasteful for toy dims (32); real wav2vec2 dims (512) are exact.
        self._kparams = []
        in_d = 1
        for i, (dim, k, stride) in enumerate(self.conv_layers):
            w, gamma, beta, _, _ = self.params[i]
            cout_p = _round_up(dim, _LANE)
            if i == 0:
                w0 = jnp.zeros((k, cout_p), jnp.float32).at[:, :dim].set(w[:, 0, :].T)
                g0 = jnp.zeros((1, cout_p), jnp.float32).at[0, :dim].set(gamma)
                b0 = jnp.zeros((1, cout_p), jnp.float32).at[0, :dim].set(beta)
                self._kparams.append((w0.astype(jnp.bfloat16), g0, b0))
            else:
                cin_p = _round_up(in_d, _LANE)
                g_groups = _cdiv(k, stride)
                assert g_groups - 1 <= _HALO, "kernel width too large for the halo block"
                wm = jnp.zeros((g_groups, stride * cin_p, cout_p), jnp.float32)
                for g in range(g_groups):
                    for s in range(stride):
                        j = g * stride + s
                        if j < k:
                            wm = wm.at[g, s * cin_p:s * cin_p + in_d, :dim].set(w[:, :, j].T)
                self._kparams.append((wm.astype(jnp.bfloat16),))
            in_d = dim

    def _plan(self, T):
        """Static time-tiling plan: valid lengths and per-layer (tile, n_tiles, tap_groups)."""
        layers = self.conv_layers
        n = len(layers)
        tv = [T]
        for (_, k, s) in layers:
            tv.append((tv[-1] - k) // s + 1)
        tiles = [None] * n
        need_out = tv[n]                       # output rows layer n-1 must produce
        for i in range(n - 1, 0, -1):
            _, k, s = layers[i]
            g = _cdiv(k, s)
            s_next = layers[i + 1][2] if i + 1 < n else 1
            base = math.lcm(_SUB, s_next)      # keep alloc divisible by next stride + sublanes
            need_out = max(need_out, tv[i + 1])
            tt = min(_round_up(_TT_MAX, base), _round_up(max(need_out, base), base))
            n_t = _cdiv(need_out, tt)
            tiles[i] = (tt, n_t, g)
            halo_sr = _HALO if g > 1 else 0
            need_out = (n_t * tt + halo_sr) * s   # rows layer i-1 must produce
        s_next = layers[1][2] if n > 1 else 1
        base0 = math.lcm(_SUB, s_next)
        need0 = max(need_out, tv[1])
        tt0 = min(_round_up(_TT_MAX, base0), _round_up(max(need0, base0), base0))
        n_t0 = _cdiv(need0, tt0)
        tiles[0] = (tt0, n_t0, None)
        return tv, tiles

    def __call__(self, x):
        # x: (B, T) waveform  ->  (B, C_last, T_last), matching the PyTorch NCL output.
        b, t_in = x.shape
        n = len(self.conv_layers)
        tv, tiles = self._plan(t_in)

        # ----- layer 0: MXU conv + two-pass GroupNorm + GELU ------------------------------
        dim0, k0, s0 = self.conv_layers[0]
        tt0, n_t0, _ = tiles[0]
        t0a = tt0 * n_t0
        pad = max(0, (t0a - 1) * s0 + k0 - t_in)
        x_pad = jnp.pad(x, ((0, 0), (0, pad)))
        idx = jnp.arange(t0a)[:, None] * s0 + jnp.arange(k0)[None, :]
        x_taps = x_pad[:, idx].astype(jnp.bfloat16)            # (B, T0a, K0), Cin == 1 is tiny
        valid = (jnp.arange(t0a) < tv[1])[None, :, None]
        x_taps = jnp.where(valid, x_taps, 0)                   # zero pad rows -> unmasked stats

        w0, g0, b0 = self._kparams[0]
        ssum, ssq = _l0_stats_call(x_taps, w0, tt=tt0, n_t=n_t0)
        inv_n = 1.0 / float(tv[1])
        mu = ssum * inv_n                                       # (B, 1, Cp0)
        var = jnp.maximum(ssq * inv_n - mu * mu, 0.0)
        inv_std = 1.0 / jnp.sqrt(var + _EPS_GN)
        scale = g0[None, :, :] * inv_std                        # folded GroupNorm affine
        shift = b0[None, :, :] - mu * scale
        h = _l0_norm_call(x_taps, w0, scale, shift, tt=tt0, n_t=n_t0)   # (B, T0a, Cp0) bf16

        # ----- layers >= 1: super-row packed conv + GELU, bf16 activations ----------------
        for i in range(1, n):
            _, k, s = self.conv_layers[i]
            (wm,) = self._kparams[i]
            tt, n_t, g = tiles[i]
            bsz, t_alloc, c = h.shape
            assert t_alloc % s == 0
            x_sr = h.reshape(bsz, t_alloc // s, s * c)          # free row-major reshape
            h = _conv_layer_call(x_sr, wm, G=g, Tt=tt, n_t=n_t)

        dim_last = self.conv_layers[-1][0]
        out = h[:, :tv[n], :dim_last].astype(jnp.float32)       # drop time / channel padding
        return jnp.transpose(out, (0, 2, 1))                    # NCL like the PyTorch module


# ---------------------------------------------------------------------------
# Pure-JAX reference (mirrors the PyTorch forward)
# ---------------------------------------------------------------------------

def _reference_forward(x, params, *, bf16_matmul=False):
    """bf16_matmul=True emulates the kernel's precision (bf16 conv operands everywhere,
    f32 accumulation/GroupNorm/GELU); everything else stays f32."""
    x = x[:, None, :]
    for (w, gamma, beta, stride, is_gn) in params:
        if bf16_matmul:
            lhs, rhs = x.astype(jnp.bfloat16), w.astype(jnp.bfloat16)
        else:
            lhs, rhs = x, w
        y = lax.conv_general_dilated(
            lhs, rhs, window_strides=(stride,), padding="VALID",
            dimension_numbers=("NCH", "OIH", "NCH"),
            preferred_element_type=jnp.float32)
        if is_gn:
            mu = jnp.mean(y, axis=2, keepdims=True)
            var = jnp.mean((y - mu) ** 2, axis=2, keepdims=True)
            y = (y - mu) / jnp.sqrt(var + _EPS_GN)
            y = y * gamma[None, :, None] + beta[None, :, None]
        x = 0.5 * y * (1.0 + jax.scipy.special.erf(y / jnp.sqrt(2.0)))
    return x


if __name__ == "__main__":
    key = jax.random.PRNGKey(0)
    key, xk, mk = jax.random.split(key, 3)

    # Small wav2vec2-like config: [(dim, kernel, stride), ...]; layer 0 gets GroupNorm.
    conv_layers = [(32, 10, 5), (32, 3, 2), (32, 2, 2)]
    B, T = 2, 512
    x = jax.random.normal(xk, (B, T), jnp.float32)

    model = ConvFeatureExtractionModel(conv_layers, mk)
    out = jax.block_until_ready(model(x))

    # Check against a reference emulating the kernel's bf16 MXU / bf16-activation precision.
    ref_bf16 = jax.block_until_ready(_reference_forward(x, model.params, bf16_matmul=True))
    assert out.shape == ref_bf16.shape, (out.shape, ref_bf16.shape)
    diff = jnp.abs(out - ref_bf16) / (1.0 + jnp.abs(ref_bf16))
    max_rel = float(jnp.max(diff))
    mean_rel = float(jnp.mean(diff))
    assert max_rel < 2e-2, max_rel        # tolerance includes bf16 storage rounding of outputs
    assert mean_rel < 2e-3, mean_rel

    # Loose check against the exact-f32 PyTorch-equivalent reference (bf16 rounding only).
    ref_f32 = jax.block_until_ready(_reference_forward(x, model.params, bf16_matmul=False))
    rel32 = float(jnp.max(jnp.abs(out - ref_f32) / (1.0 + jnp.abs(ref_f32))))
    assert rel32 < 5e-2, rel32

    print("KERNEL_OK")
</pallas_src>

<mosaic_0001>
module attributes {stable_mosaic.version = 11 : i64} {
  func.func @_l0_stats_kernel(%arg0: i32, %arg1: i32, %arg2: memref<1x160x10xbf16, #tpu.memory_space<vmem>>, %arg3: memref<10x128xbf16, #tpu.memory_space<vmem>>, %arg4: memref<1x1x128xf32, #tpu.memory_space<vmem>>, %arg5: memref<1x1x128xf32, #tpu.memory_space<vmem>>) attributes {dimension_semantics = [#tpu.dimension_semantics<parallel>, #tpu.dimension_semantics<arbitrary>], iteration_bounds = array<i64: 2, 1>, scalar_prefetch = 0 : i64, scratch_operands = 0 : i64, tpu.core_type = #tpu.core_type<tc>, window_params = [{transform_indices = @transform_0, window_bounds = array<i64: 1, 160, 10>}, {pipeline_mode = #tpu.pipeline_mode<synchronous>, transform_indices = @transform_1, window_bounds = array<i64: 10, 128>}, {transform_indices = @transform_2, window_bounds = array<i64: 1, 1, 128>}, {transform_indices = @transform_3, window_bounds = array<i64: 1, 1, 128>}]} {
    %c0_i32 = arith.constant 0 : i32
    %0 = arith.cmpi eq, %arg1, %c0_i32 : i32
    %1 = arith.extui %0 : i1 to i32
    %c0_i32_0 = arith.constant 0 : i32
    %2 = arith.cmpi ne, %1, %c0_i32_0 : i32
    scf.if %2 {
      %cst_19 = arith.constant 0.000000e+00 : f32
      %24 = vector.broadcast %cst_19 : f32 to vector<1x128xf32>
      %c0_20 = arith.constant 0 : index
      %c0_21 = arith.constant 0 : index
      %c0_22 = arith.constant 0 : index
      %25 = vector.load %arg4[%c0_20, %c0_21, %c0_22] : memref<1x1x128xf32, #tpu.memory_space<vmem>>, vector<1x1x128xf32>
      %26 = vector.shape_cast %25 : vector<1x1x128xf32> to vector<1x128xf32>
      %27 = vector.shape_cast %24 : vector<1x128xf32> to vector<1x1x128xf32>
      tpu.vector_store %arg4[%c0_20, %c0_21, %c0_22], %27 {strides = array<i32>} : memref<1x1x128xf32, #tpu.memory_space<vmem>>, vector<1x1x128xf32>,
      %cst_23 = arith.constant 0.000000e+00 : f32
      %28 = vector.broadcast %cst_23 : f32 to vector<1x128xf32>
      %c0_24 = arith.constant 0 : index
      %c0_25 = arith.constant 0 : index
      %c0_26 = arith.constant 0 : index
      %29 = vector.load %arg5[%c0_24, %c0_25, %c0_26] : memref<1x1x128xf32, #tpu.memory_space<vmem>>, vector<1x1x128xf32>
      %30 = vector.shape_cast %29 : vector<1x1x128xf32> to vector<1x128xf32>
      %31 = vector.shape_cast %28 : vector<1x128xf32> to vector<1x1x128xf32>
      tpu.vector_store %arg5[%c0_24, %c0_25, %c0_26], %31 {strides = array<i32>} : memref<1x1x128xf32, #tpu.memory_space<vmem>>, vector<1x1x128xf32>,
    } else {
    }
    %c0 = arith.constant 0 : index
    %c0_1 = arith.constant 0 : index
    %c0_2 = arith.constant 0 : index
    %3 = vector.load %arg2[%c0, %c0_1, %c0_2] : memref<1x160x10xbf16, #tpu.memory_space<vmem>>, vector<1x160x10xbf16>
    %4 = vector.shape_cast %3 : vector<1x160x10xbf16> to vector<160x10xbf16>
    %c0_3 = arith.constant 0 : index
    %c0_4 = arith.constant 0 : index
    %5 = vector.load %arg3[%c0_3, %c0_4] : memref<10x128xbf16, #tpu.memory_space<vmem>>, vector<10x128xbf16>
    %cst = arith.constant dense<0.000000e+00> : vector<160x128xf32>
    %6 = tpu.matmul %4, %5, %cst {dimension_numbers = #tpu.dot_dimension_numbers<[1], [0], [0], [1], [0, 0, 1, 1], [], []>} : vector<160x10xbf16>, vector<10x128xbf16>, vector<160x128xf32> -> vector<160x128xf32>
    %c0_5 = arith.constant 0 : index
    %c0_6 = arith.constant 0 : index
    %c0_7 = arith.constant 0 : index
    %7 = vector.load %arg4[%c0_5, %c0_6, %c0_7] : memref<1x1x128xf32, #tpu.memory_space<vmem>>, vector<1x1x128xf32>
    %8 = vector.shape_cast %7 : vector<1x1x128xf32> to vector<1x128xf32>
    %cst_8 = arith.constant dense<0.000000e+00> : vector<128xf32>
    %9 = vector.multi_reduction <add>, %6, %cst_8 [0] : vector<160x128xf32> to vector<128xf32>
    %10 = vector.shape_cast %9 : vector<128xf32> to vector<1x128xf32>
    %11 = arith.addf %8, %10 : vector<1x128xf32>
    %c0_9 = arith.constant 0 : index
    %c0_10 = arith.constant 0 : index
    %c0_11 = arith.constant 0 : index
    %12 = vector.load %arg4[%c0_9, %c0_10, %c0_11] : memref<1x1x128xf32, #tpu.memory_space<vmem>>, vector<1x1x128xf32>
    %13 = vector.shape_cast %12 : vector<1x1x128xf32> to vector<1x128xf32>
    %14 = vector.shape_cast %11 : vector<1x128xf32> to vector<1x1x128xf32>
    tpu.vector_store %arg4[%c0_9, %c0_10, %c0_11], %14 {strides = array<i32>} : memref<1x1x128xf32, #tpu.memory_space<vmem>>, vector<1x1x128xf32>,
    %c0_12 = arith.constant 0 : index
    %c0_13 = arith.constant 0 : index
    %c0_14 = arith.constant 0 : index
    %15 = vector.load %arg5[%c0_12, %c0_13, %c0_14] : memref<1x1x128xf32, #tpu.memory_space<vmem>>, vector<1x1x128xf32>
    %16 = vector.shape_cast %15 : vector<1x1x128xf32> to vector<1x128xf32>
    %17 = arith.mulf %6, %6 : vector<160x128xf32>
    %cst_15 = arith.constant dense<0.000000e+00> : vector<128xf32>
    %18 = vector.multi_reduction <add>, %17, %cst_15 [0] : vector<160x128xf32> to vector<128xf32>
    %19 = vector.shape_cast %18 : vector<128xf32> to vector<1x128xf32>
    %20 = arith.addf %16, %19 : vector<1x128xf32>
    %c0_16 = arith.constant 0 : index
    %c0_17 = arith.constant 0 : index
    %c0_18 = arith.constant 0 : index
    %21 = vector.load %arg5[%c0_16, %c0_17, %c0_18] : memref<1x1x128xf32, #tpu.memory_space<vmem>>, vector<1x1x128xf32>
    %22 = vector.shape_cast %21 : vector<1x1x128xf32> to vector<1x128xf32>
    %23 = vector.shape_cast %20 : vector<1x128xf32> to vector<1x1x128xf32>
    tpu.vector_store %arg5[%c0_16, %c0_17, %c0_18], %23 {strides = array<i32>} : memref<1x1x128xf32, #tpu.memory_space<vmem>>, vector<1x1x128xf32>,
    return
  }
  func.func @transform_0(%arg0: i32, %arg1: i32) -> (i32, i32, i32) {
    %c0_i32 = arith.constant 0 : i32
    %c0_i32_0 = arith.constant 0 : i32
    return %arg0, %arg1, %c0_i32 : i32, i32, i32
  }
  func.func @transform_1(%arg0: i32, %arg1: i32) -> (i32, i32) {
    %c0_i32 = arith.constant 0 : i32
    %c0_i32_0 = arith.constant 0 : i32
    %c0_i32_1 = arith.constant 0 : i32
    return %c0_i32, %c0_i32_0 : i32, i32
  }
  func.func @transform_2(%arg0: i32, %arg1: i32) -> (i32, i32, i32) {
    %c0_i32 = arith.constant 0 : i32
    %c0_i32_0 = arith.constant 0 : i32
    %c0_i32_1 = arith.constant 0 : i32
    return %arg0, %c0_i32, %c0_i32_0 : i32, i32, i32
  }
  func.func @transform_3(%arg0: i32, %arg1: i32) -> (i32, i32, i32) {
    %c0_i32 = arith.constant 0 : i32
    %c0_i32_0 = arith.constant 0 : i32
    %c0_i32_1 = arith.constant 0 : i32
    return %arg0, %c0_i32, %c0_i32_0 : i32, i32, i32
  }
}

</mosaic_0001>

<llo_original>
// kernel: tpu_custom_call.1
$region0: #{tpu_custom_call.1}
  #allocation0 [shape = 'u32[]', space=smem, size = 0x4, offset = 0x4, fixed_abs, tag = 'smem constant byte address 0x4 - core index']
  #allocation1 [shape = 'u32[144,128]{1,0:T(1,128)}', space=vmem, size = 0x12000, scoped, tag = 'internal scratch']
  %s0 = inlined_call_operand.vmem [shape: bf16[2,160,10], index: 0, kind: input, shape index: {}]
  %s1 = inlined_call_operand.vmem [shape: bf16[10,128], index: 1, kind: input, shape index: {}]
  %s2 = inlined_call_operand.hbm [shape: f32[2,1,128], index: 2, kind: output, shape index: {0}]
  %s3 = inlined_call_operand.hbm [shape: f32[2,1,128], index: 3, kind: output, shape index: {1}]
  %4 = xla_tuple %s2, %s3
  %s5 = sld [smem:[#allocation0]]
  $region53: #{tpu_custom_call.1} parent=0
    _
  %s7 = ssub.s32 1, %s5
  %s8 = scalar_select 0, %s7, %s5
  $region1: #{tpu_custom_call.1} parent=0
    #allocation2 [shape = 'u8[1024]{0}', space=vmem, size = 0x400, scoped, tag = 'output window, operand 0']
    #allocation3 [shape = 's32[2]{0}', space=sflag, size = 0x8, scoped, tag = 'scoped memory for tpu_custom_call.1']
    #allocation4 [shape = 'u8[1024]{0}', space=vmem, size = 0x400, scoped, tag = 'output window, operand 1']
    #allocation5 [shape = 's32[2]{0}', space=sflag, size = 0x8, scoped, tag = 'scoped memory for tpu_custom_call.1']
    %9 = vsyncpa [#allocation3], 0
    %s10 = scalar_lea.sflag [#allocation3], 1
    %11 = vsyncpa %s10, 0
    %12 = vsyncpa [#allocation5], 0
    %s13 = scalar_lea.sflag [#allocation5], 1
    %14 = vsyncpa %s13, 0
    loop: start=0, step=1, limit=4
    $region2: #{tpu_custom_call.1} parent=1 // loop_pre_header
      _
    $region3: #{tpu_custom_call.1} parent=1 // loop_header
      %s16 = sphi 0, %s20
      %p17 = scmp.ge.s32.totalorder %s16, 4
      %s23 = sphi 0, %s35
      %s24 = sphi 0, %s31
      %s25 = sphi 0, %s23
      %s26 = sphi 0, %s24
      %s27 = sphi 0, %s25
      %s28 = sphi 0, %s26
      %s40 = sphi 0, %s42
      %s43 = sphi 0, %s40
      %s44 = sphi 0, %s43
      %s60 = sphi 0, %s44
      %s64 = sphi 0, %s64
      %s66 = sphi 0, %s64
      %s67 = sphi 0, %s66
      %s81 = sphi 0, %s67
      %s87 = sphi 0, %s89
      %s90 = sphi 0, %s87
      %s91 = sphi 0, %s90
      %s107 = sphi 0, %s91
      %s113 = sphi 0, %s115
      %s116 = sphi 0, %s113
      %s117 = sphi 0, %s116
      %s133 = sphi 0, %s117
    $region4: #{tpu_custom_call.1} parent=1 // loop_header_branch
      %19 = sbr.rel (%p17) target = $region8
    $region5: #{tpu_custom_call.1} parent=1 // loop_body
      %s21 = ssub.s32 %s16, 1
      %s22 = ssub.s32 %s16, 2
      %s29 = sadd.s32 1, %s24
      %p30 = scmp.ge.s32.totalorder %s29, 1
      %s31 = scalar_select %p30, 0, %s29
      %s32 = sadd.s32 1, %s23
      %s33 = scalar_select %p30, %s32, %s23
      %p34 = scmp.ge.s32.totalorder %s33, 2
      %s35 = scalar_select %p34, 0, %s33
      %s36 = ssub.s32 %s23, %s35
      %s37 = ssub.s32 %s24, %s31
      %s38 = sor.u32 %s36, %s37
      %p39 = scmp.eq.s32.totalorder %s38, 0
      %s41 = sadd.s32 %s40, 1
      %s42 = scalar_select %p39, %s40, %s41
      %p45 = pneg %p39
      %p46 = scmp.eq.s32.totalorder %s16, 1
      %p47 = por %p45, %p46
      %p48 = scmp.ne.s32.totalorder %s40, %s43
      %p49 = scmp.eq.s32.totalorder %s16, 0
      %p50 = por %p48, %p49
      %p51 = scmp.ne.s32.totalorder %s40, %s43
      %p52 = scmp.eq.s32.totalorder %s21, 1
      %p53 = por %p51, %p52
      %p54 = scmp.ne.s32.totalorder %s43, %s44
      %p55 = scmp.eq.s32.totalorder %s21, 0
      %p56 = por %p54, %p55
      %p57 = scmp.ne.s32.totalorder %s43, %s44
      %p58 = scmp.eq.s32.totalorder %s22, 1
      %p59 = por %p57, %p58
      %p61 = scmp.ne.s32.totalorder %s44, %s60
      %p62 = scmp.eq.s32.totalorder %s22, 0
      %p63 = por %p61, %p62
      %s65 = sadd.s32 %s64, 1
      %p68 = scmp.eq.s32.totalorder %s16, 1
      %p69 = scmp.ne.s32.totalorder %s64, %s66
      %p70 = scmp.eq.s32.totalorder %s16, 0
      %p71 = por %p69, %p70
      %p72 = scmp.ne.s32.totalorder %s64, %s66
      %p73 = scmp.eq.s32.totalorder %s21, 1
      %p74 = por %p72, %p73
      %p75 = scmp.ne.s32.totalorder %s66, %s67
      %p76 = scmp.eq.s32.totalorder %s21, 0
      %p77 = por %p75, %p76
      %p78 = scmp.ne.s32.totalorder %s66, %s67
      %p79 = scmp.eq.s32.totalorder %s22, 1
      %p80 = por %p78, %p79
      %p82 = scmp.ne.s32.totalorder %s67, %s81
      %p83 = scmp.eq.s32.totalorder %s22, 0
      %p84 = por %p82, %p83
      %s85 = ssub.s32 %s23, %s35
      %p86 = scmp.eq.s32.totalorder %s85, 0
      %s88 = sadd.s32 %s87, 1
      %s89 = scalar_select %p86, %s87, %s88
      %p92 = pneg %p86
      %p93 = scmp.eq.s32.totalorder %s16, 1
      %p94 = por %p92, %p93
      %p95 = scmp.ne.s32.totalorder %s87, %s90
      %p96 = scmp.eq.s32.totalorder %s16, 0
      %p97 = por %p95, %p96
      %p98 = scmp.ne.s32.totalorder %s87, %s90
      %p99 = scmp.eq.s32.totalorder %s21, 1
      %p100 = por %p98, %p99
      %p101 = scmp.ne.s32.totalorder %s90, %s91
      %p102 = scmp.eq.s32.totalorder %s21, 0
      %p103 = por %p101, %p102
      %p104 = scmp.ne.s32.totalorder %s90, %s91
      %p105 = scmp.eq.s32.totalorder %s22, 1
      %p106 = por %p104, %p105
      %p108 = scmp.ne.s32.totalorder %s91, %s107
      %p109 = scmp.eq.s32.totalorder %s22, 0
      %p110 = por %p108, %p109
      %s111 = ssub.s32 %s23, %s35
      %p112 = scmp.eq.s32.totalorder %s111, 0
      %s114 = sadd.s32 %s113, 1
      %s115 = scalar_select %p112, %s113, %s114
      %p118 = pneg %p112
      %p119 = scmp.eq.s32.totalorder %s16, 1
      %p120 = por %p118, %p119
      %p121 = scmp.ne.s32.totalorder %s113, %s116
      %p122 = scmp.eq.s32.totalorder %s16, 0
      %p123 = por %p121, %p122
      %p124 = scmp.ne.s32.totalorder %s113, %s116
      %p125 = scmp.eq.s32.totalorder %s21, 1
      %p126 = por %p124, %p125
      %p127 = scmp.ne.s32.totalorder %s116, %s117
      %p128 = scmp.eq.s32.totalorder %s21, 0
      %p129 = por %p127, %p128
      %p130 = scmp.ne.s32.totalorder %s116, %s117
      %p131 = scmp.eq.s32.totalorder %s22, 1
      %p132 = por %p130, %p131
      %p134 = scmp.ne.s32.totalorder %s117, %s133
      %p135 = scmp.eq.s32.totalorder %s22, 0
      %p136 = por %p134, %p135
      %p137 = scmp.le.s32.totalorder 1, %s16
      %p138 = scmp.lt.s32.totalorder %s16, 3
      %p139 = pnand %p137, %p138
      %p140 = pneg %p139
      // Predicated region
      $region9: #{tpu_custom_call.1} parent=5 // pred_check
        _
      $region10: #{tpu_custom_call.1} parent=5 // pred_check_branch
        %142 = sbr.rel (%p139) target = $region12
      $region11: #{tpu_custom_call.1} parent=5 // pred_region
        %s143 = ssub.s32 %s16, 1
        // Predicated region
        $region13: #{tpu_custom_call.1} parent=11 // pred_check
          %p144 = pneg %p77
        $region14: #{tpu_custom_call.1} parent=11 // pred_check_branch
          %146 = sbr.rel (%p144) target = $region16
        $region15: #{tpu_custom_call.1} parent=11 // pred_region
          _
        $region16: #{tpu_custom_call.1} parent=11 // pred_fallthru
          _
      $region12: #{tpu_custom_call.1} parent=5 // pred_fallthru
        _
      %p147 = scmp.lt.s32.totalorder %s16, 2
      // Predicated region
      $region17: #{tpu_custom_call.1} parent=5 // pred_check
        %p148 = pneg %p147
      $region18: #{tpu_custom_call.1} parent=5 // pred_check_branch
        %150 = sbr.rel (%p148) target = $region20
      $region19: #{tpu_custom_call.1} parent=5 // pred_region
        // Predicated region
        $region21: #{tpu_custom_call.1} parent=19 // pred_check
          %p151 = pneg %p50
        $region22: #{tpu_custom_call.1} parent=19 // pred_check_branch
          %153 = sbr.rel (%p151) target = $region24
        $region23: #{tpu_custom_call.1} parent=19 // pred_region
          %s154 = smul.u32 20, %s24
          %p155 = scmp.lt.s32.totalorder %s23, 1
          %s156 = scalar_select %p155, %s23, 1
          %p157 = scmp.lt.s32.totalorder %s154, 19
          %s158 = scalar_select %p157, %s154, 19
          %s159 = smul.addr %s156, 20
          %s160 = sadd.s32 %s158, %s159
          %s161 = smul.addr %s160, 4
          %s162 = scalar_lea.vmem %s0, %s161
          %s163 = smul.u32 20, %s24
        $region24: #{tpu_custom_call.1} parent=19 // pred_fallthru
          _
      $region20: #{tpu_custom_call.1} parent=5 // pred_fallthru
        _
      %p164 = scmp.le.s32.totalorder 1, %s16
      %p165 = scmp.lt.s32.totalorder %s16, 3
      %p166 = pnand %p164, %p165
      %p167 = pneg %p166
      // Predicated region
      $region25: #{tpu_custom_call.1} parent=5 // pred_check
        _
      $region26: #{tpu_custom_call.1} parent=5 // pred_check_branch
        %169 = sbr.rel (%p166) target = $region28
      $region27: #{tpu_custom_call.1} parent=5 // pred_region
        %s170 = ssub.s32 %s16, 1
        %s171 = smul.u32 20, %s26
        %p172 = scmp.lt.s32.totalorder %s25, 1
        %s173 = scalar_select %p172, %s25, 1
        %p174 = scmp.lt.s32.totalorder %s171, 19
        %s175 = scalar_select %p174, %s171, 19
        %s176 = smul.addr %s173, 20
        %s177 = sadd.s32 %s175, %s176
        %s178 = smul.addr %s177, 4
        %s179 = scalar_lea.vmem %s0, %s178
        %p180 = pneg %p56
        %p181 = pneg %p53
        %p182 = pneg %p77
        %p183 = pneg %p74
        %p184 = pneg %p103
        %p185 = pneg %p100
        %s186 = sand.u32 %s90, 1
        %s187 = scalar_lea.sflag [#allocation3], %s186
        %s188 = sand.u32 %s90, 1
        %s189 = scalar_lea.vmem [#allocation2], %s188
        %p190 = pneg %p129
        %p191 = pneg %p126
        %s192 = sand.u32 %s116, 1
        %s193 = scalar_lea.sflag [#allocation5], %s192
        %s194 = sand.u32 %s116, 1
        %s195 = scalar_lea.vmem [#allocation4], %s194
        %s196 = smul.u32 20, %s26
        %p197 = scmp.lt.s32.totalorder %s25, 1
        %s198 = scalar_select %p197, %s25, 1
        %p199 = scmp.lt.s32.totalorder %s196, 19
        %s200 = scalar_select %p199, %s196, 19
        %s201 = smul.addr %s198, 20
        %s202 = sadd.s32 %s200, %s201
        %s203 = smul.addr %s202, 4
        %s204 = scalar_lea.vmem %s0, %s203
        %s205 = smul.u32 20, %s26
        %p207 = scmp.eq.s32.totalorder %s26, 0
        // Predicated region
        $region29: #{tpu_custom_call.1} parent=27 // pred_check
          %p208 = pneg %p207
        $region30: #{tpu_custom_call.1} parent=27 // pred_check_branch
          %210 = sbr.rel (%p208) target = $region32
        $region31: #{tpu_custom_call.1} parent=27 // pred_region
          %211 = vst [vmem:[%s189] sm:$0x1] 0.0
          %212 = vst [vmem:[%s195] sm:$0x1] 0.0
        $region32: #{tpu_custom_call.1} parent=27 // pred_fallthru
          _
        %v213 = vld [vmem:[%s204] sm:$0xf]
        %v214 = vld [vmem:[%s204 + $0x4] sm:$0xf]
        %v215 = vld [vmem:[%s204 + $0x8] sm:$0xf]
        %v216 = vld [vmem:[%s204 + $0xc] sm:$0xf]
        %v217 = vld [vmem:[%s204 + $0x10] sm:$0xf]
        %v218 = vld [vmem:[%s204 + $0x14] sm:$0xf]
        %v219 = vld [vmem:[%s204 + $0x18] sm:$0xf]
        %v220 = vld [vmem:[%s204 + $0x1c] sm:$0xf]
        %v221 = vld [vmem:[%s204 + $0x20] sm:$0xf]
        %v222 = vld [vmem:[%s204 + $0x24] sm:$0xf]
        %v223 = vld [vmem:[%s204 + $0x28] sm:$0xf]
        %v224 = vld [vmem:[%s204 + $0x2c] sm:$0xf]
        %v225 = vld [vmem:[%s204 + $0x30] sm:$0xf]
        %v226 = vld [vmem:[%s204 + $0x34] sm:$0xf]
        %v227 = vld [vmem:[%s204 + $0x38] sm:$0xf]
        %v228 = vld [vmem:[%s204 + $0x3c] sm:$0xf]
        %v229 = vld [vmem:[%s204 + $0x40] sm:$0xf]
        %v230 = vld [vmem:[%s204 + $0x44] sm:$0xf]
        %v231 = vld [vmem:[%s204 + $0x48] sm:$0xf]
        %v232 = vld [vmem:[%s204 + $0x4c] sm:$0xf]
        %v233 = vld [vmem:[%s1] sm:$0xf]
        %v234 = vld [vmem:[%s1 + $0x4] sm:$0x1]
        %v255 = vunpack.c.l.b16 %v213
        %v256 = vunpack.c.l.b16 %v214
        %v257 = vunpack.c.l.b16 %v215
        %v258 = vunpack.c.l.b16 %v216
        %v259 = vunpack.c.l.b16 %v217
        %v260 = vunpack.c.l.b16 %v218
        %v261 = vunpack.c.l.b16 %v219
        %v262 = vunpack.c.l.b16 %v220
        %v263 = vunpack.c.l.b16 %v221
        %v264 = vunpack.c.l.b16 %v222
        %v265 = vunpack.c.l.b16 %v223
        %v266 = vunpack.c.l.b16 %v224
        %v267 = vunpack.c.l.b16 %v225
        %v268 = vunpack.c.l.b16 %v226
        %v269 = vunpack.c.l.b16 %v227
        %v270 = vunpack.c.l.b16 %v228
        %v271 = vunpack.c.l.b16 %v229
        %v272 = vunpack.c.l.b16 %v230
        %v273 = vunpack.c.l.b16 %v231
        %v274 = vunpack.c.l.b16 %v232
        %v275 = vpack.c.b16 %v256, %v255
        %v276 = vpack.c.b16 %v258, %v257
        %v277 = vpack.c.b16 %v260, %v259
        %v278 = vpack.c.b16 %v262, %v261
        %v279 = vpack.c.b16 %v264, %v263
        %v280 = vpack.c.b16 %v266, %v265
        %v281 = vpack.c.b16 %v268, %v267
        %v282 = vpack.c.b16 %v270, %v269
        %v283 = vpack.c.b16 %v272, %v271
        %v284 = vpack.c.b16 %v274, %v273
        %v287 = vunpack.c.l.b16 %v233
        %v288 = vunpack.c.l.b16 %v234
        %v289 = vpack.c.b16 %v288, %v287
        %vm290 = vcmask 80896
        %v292 = vsel %vm290, %v275, 0
        %v295 = vsel %vm290, %v276, 0
        %v298 = vsel %vm290, %v277, 0
        %v301 = vsel %vm290, %v278, 0
        %v304 = vsel %vm290, %v279, 0
        %v307 = vsel %vm290, %v280, 0
        %v310 = vsel %vm290, %v281, 0
        %v313 = vsel %vm290, %v282, 0
        %v316 = vsel %vm290, %v283, 0
        %v319 = vsel %vm290, %v284, 0
        %vm321 = vcmask 1044480
        %v323 = vsel %vm321, %v289, 0
        %325 = vmatprep.subr.bf16.mxu0 0
        %326 = vmatpush1.bf16.msra.mxu0 %v323
        %327 = vmatprep.subr.bf16.mxu0 0
        %328 = vmatpush1.bf16.msra.mxu0 0
        %329 = vmatprep.subr.bf16.mxu0 0
        %330 = vmatpush1.bf16.msra.mxu0 0
        %331 = vmatprep.subr.bf16.mxu0 0
        %332 = vmatpush1.bf16.msra.mxu0 0
        %333 = vmatprep.subr.bf16.mxu0 0
        %334 = vmatpush1.bf16.msra.mxu0 0
        %335 = vmatprep.subr.bf16.mxu0 0
        %336 = vmatpush1.bf16.msra.mxu0 0
        %337 = vmatprep.subr.bf16.mxu0 0
        %338 = vmatpush1.bf16.msra.mxu0 0
        %339 = vmatprep.subr.bf16.mxu0 0
        %340 = vmatpush1.bf16.msra.mxu0 0
        %341 = vmatprep.subr.bf16.mxu0 0
        %342 = vmatpush1.bf16.msra.mxu0 0
        %343 = vmatprep.subr.bf16.mxu0 0
        %344 = vmatpush1.bf16.msra.mxu0 0
        %345 = vmatprep.subr.bf16.mxu0 0
        %346 = vmatpush1.bf16.msra.mxu0 0
        %347 = vmatprep.subr.bf16.mxu0 0
        %348 = vmatpush1.bf16.msra.mxu0 0
        %349 = vmatprep.subr.bf16.mxu0 0
        %350 = vmatpush1.bf16.msra.mxu0 0
        %351 = vmatprep.subr.bf16.mxu0 0
        %352 = vmatpush1.bf16.msra.mxu0 0
        %353 = vmatprep.subr.bf16.mxu0 0
        %354 = vmatpush1.bf16.msra.mxu0 0
        %355 = vmatprep.subr.bf16.mxu0 0
        %356 = vmatpush1.bf16.msra.mxu0 0
        %357 = vmatprep.mubr.bf16.mxu0 0
        %358 = vmatmul.mubr.bf16.gmra.mrb[0].mxu0 %v292
        %v359 = vpop.f32.mrb[0].mxu0
        %v360 = vadd.f32 0.0, %v359
        %v361 = vpop.f32.mrb[0].mxu0
        %v362 = vpop.f32.mrb[0].mxu0
        %v363 = vadd.f32 0.0, %v362
        %v364 = vpop.f32.mrb[0].mxu0
        %365 = vmatprep.mubr.bf16.mxu0 0
        %366 = vmatmul.mubr.bf16.gmra.mrb[0].mxu0 %v295
        %v367 = vpop.f32.mrb[0].mxu0
        %v368 = vadd.f32 0.0, %v367
        %v369 = vpop.f32.mrb[0].mxu0
        %v370 = vpop.f32.mrb[0].mxu0
        %v371 = vadd.f32 0.0, %v370
        %v372 = vpop.f32.mrb[0].mxu0
        %373 = vmatprep.mubr.bf16.mxu0 0
        %374 = vmatmul.mubr.bf16.gmra.mrb[0].mxu0 %v298
        %v375 = vpop.f32.mrb[0].mxu0
        %v376 = vadd.f32 0.0, %v375
        %v377 = vpop.f32.mrb[0].mxu0
        %v378 = vpop.f32.mrb[0].mxu0
        %v379 = vadd.f32 0.0, %v378
        %v380 = vpop.f32.mrb[0].mxu0
        %381 = vmatprep.mubr.bf16.mxu0 0
        %382 = vmatmul.mubr.bf16.gmra.mrb[0].mxu0 %v301
        %v383 = vpop.f32.mrb[0].mxu0
        %v384 = vadd.f32 0.0, %v383
        %v385 = vpop.f32.mrb[0].mxu0
        %v386 = vpop.f32.mrb[0].mxu0
        %v387 = vadd.f32 0.0, %v386
        %v388 = vpop.f32.mrb[0].mxu0
        %389 = vmatprep.mubr.bf16.mxu0 0
        %390 = vmatmul.mubr.bf16.gmra.mrb[0].mxu0 %v304
        %v391 = vpop.f32.mrb[0].mxu0
        %v392 = vadd.f32 0.0, %v391
        %v393 = vpop.f32.mrb[0].mxu0
        %v394 = vpop.f32.mrb[0].mxu0
        %v395 = vadd.f32 0.0, %v394
        %v396 = vpop.f32.mrb[0].mxu0
        %397 = vmatprep.mubr.bf16.mxu0 0
        %398 = vmatmul.mubr.bf16.gmra.mrb[0].mxu0 %v307
        %v399 = vpop.f32.mrb[0].mxu0
        %v400 = vadd.f32 0.0, %v399
        %v401 = vpop.f32.mrb[0].mxu0
        %v402 = vpop.f32.mrb[0].mxu0
        %v403 = vadd.f32 0.0, %v402
        %v404 = vpop.f32.mrb[0].mxu0
        %405 = vmatprep.mubr.bf16.mxu0 0
        %406 = vmatmul.mubr.bf16.gmra.mrb[0].mxu0 %v310
        %v407 = vpop.f32.mrb[0].mxu0
        %v408 = vadd.f32 0.0, %v407
        %v409 = vpop.f32.mrb[0].mxu0
        %v410 = vpop.f32.mrb[0].mxu0
        %v411 = vadd.f32 0.0, %v410
        %v412 = vpop.f32.mrb[0].mxu0
        %413 = vmatprep.mubr.bf16.mxu0 0
        %414 = vmatmul.mubr.bf16.gmra.mrb[0].mxu0 %v313
        %v415 = vpop.f32.mrb[0].mxu0
        %v416 = vadd.f32 0.0, %v415
        %v417 = vpop.f32.mrb[0].mxu0
        %v418 = vpop.f32.mrb[0].mxu0
        %v419 = vadd.f32 0.0, %v418
        %v420 = vpop.f32.mrb[0].mxu0
        %421 = vmatprep.mubr.bf16.mxu0 0
        %422 = vmatmul.mubr.bf16.gmra.mrb[0].mxu0 %v316
        %v423 = vpop.f32.mrb[0].mxu0
        %v424 = vadd.f32 0.0, %v423
        %v425 = vpop.f32.mrb[0].mxu0
        %v426 = vpop.f32.mrb[0].mxu0
        %v427 = vadd.f32 0.0, %v426
        %v428 = vpop.f32.mrb[0].mxu0
        %429 = vmatprep.mubr.bf16.mxu0 0
        %430 = vmatmul.mubr.bf16.gmra.mrb[0].mxu0 %v319
        %v431 = vpop.f32.mrb[0].mxu0
        %v432 = vadd.f32 0.0, %v431
        %v433 = vpop.f32.mrb[0].mxu0
        %v434 = vpop.f32.mrb[0].mxu0
        %v435 = vadd.f32 0.0, %v434
        %v436 = vpop.f32.mrb[0].mxu0
        %437 = vdwg.mxu0
        %v438 = vld [vmem:[%s189] sm:$0x1]
        %v439 = vadd.f32 %v360, %v363
        %v440 = vadd.f32 %v439, %v368
        %v441 = vadd.f32 %v440, %v371
        %v442 = vadd.f32 %v441, %v376
        %v443 = vadd.f32 %v442, %v379
        %v444 = vadd.f32 %v443, %v384
        %v445 = vadd.f32 %v444, %v387
        %v446 = vadd.f32 %v445, %v392
        %v447 = vadd.f32 %v446, %v395
        %v448 = vadd.f32 %v447, %v400
        %v449 = vadd.f32 %v448, %v403
        %v450 = vadd.f32 %v449, %v408
        %v451 = vadd.f32 %v450, %v411
        %v452 = vadd.f32 %v451, %v416
        %v453 = vadd.f32 %v452, %v419
        %v454 = vadd.f32 %v453, %v424
        %v455 = vadd.f32 %v454, %v427
        %v456 = vadd.f32 %v455, %v432
        %v457 = vadd.f32 %v456, %v435
        %v458 = vrot.slane %v457, 4
        %v459 = vadd.f32 %v457, %v458
        %v460 = vrot.slane %v459, 2
        %v461 = vadd.f32 %v459, %v460
        %v462 = vrot.slane %v461, 1
        %v463 = vadd.f32 %v461, %v462
        %v464 = vadd.f32 %v438, %v463
        %465 = vst [vmem:[%s189] sm:$0x1] %v464
        %v466 = vld [vmem:[%s195] sm:$0x1]
        %v467 = vmul.f32 %v360, %v360
        %v468 = vmul.f32 %v363, %v363
        %v469 = vmul.f32 %v368, %v368
        %v470 = vmul.f32 %v371, %v371
        %v471 = vmul.f32 %v376, %v376
        %v472 = vmul.f32 %v379, %v379
        %v473 = vmul.f32 %v384, %v384
        %v474 = vmul.f32 %v387, %v387
        %v475 = vmul.f32 %v392, %v392
        %v476 = vmul.f32 %v395, %v395
        %v477 = vmul.f32 %v400, %v400
        %v478 = vmul.f32 %v403, %v403
        %v479 = vmul.f32 %v408, %v408
        %v480 = vmul.f32 %v411, %v411
        %v481 = vmul.f32 %v416, %v416
        %v482 = vmul.f32 %v419, %v419
        %v483 = vmul.f32 %v424, %v424
        %v484 = vmul.f32 %v427, %v427
        %v485 = vmul.f32 %v432, %v432
        %v486 = vmul.f32 %v435, %v435
        %v487 = vadd.f32 %v467, %v468
        %v488 = vadd.f32 %v487, %v469
        %v489 = vadd.f32 %v488, %v470
        %v490 = vadd.f32 %v489, %v471
        %v491 = vadd.f32 %v490, %v472
        %v492 = vadd.f32 %v491, %v473
        %v493 = vadd.f32 %v492, %v474
        %v494 = vadd.f32 %v493, %v475
        %v495 = vadd.f32 %v494, %v476
        %v496 = vadd.f32 %v495, %v477
        %v497 = vadd.f32 %v496, %v478
        %v498 = vadd.f32 %v497, %v479
        %v499 = vadd.f32 %v498, %v480
        %v500 = vadd.f32 %v499, %v481
        %v501 = vadd.f32 %v500, %v482
        %v502 = vadd.f32 %v501, %v483
        %v503 = vadd.f32 %v502, %v484
        %v504 = vadd.f32 %v503, %v485
        %v505 = vadd.f32 %v504, %v486
        %v506 = vrot.slane %v505, 4
        %v507 = vadd.f32 %v505, %v506
        %v508 = vrot.slane %v507, 2
        %v509 = vadd.f32 %v507, %v508
        %v510 = vrot.slane %v509, 1
        %v511 = vadd.f32 %v509, %v510
        %v512 = vadd.f32 %v466, %v511
        %513 = vst [vmem:[%s195] sm:$0x1] %v512
        %s514 = sand.u32 %s90, 1
        %s515 = scalar_lea.sflag [#allocation3], %s514
        %s516 = sand.u32 %s90, 1
        %s517 = scalar_lea.vmem [#allocation2], %s516
        %s518 = sand.u32 %s116, 1
        %s519 = scalar_lea.sflag [#allocation5], %s518
        %s520 = sand.u32 %s116, 1
        %s521 = scalar_lea.vmem [#allocation4], %s520
        // Predicated region
        $region33: #{tpu_custom_call.1} parent=27 // pred_check
          %p522 = pneg %p100
        $region34: #{tpu_custom_call.1} parent=27 // pred_check_branch
          %524 = sbr.rel (%p522) target = $region36
        $region35: #{tpu_custom_call.1} parent=27 // pred_region
          %s526 = ssub.s32 16, 16
          %527 = vsyncadd %s515, %s526
          %s528 = smul.addr %s25, 16
          %s529 = scalar_lea.hbm %s2, %s528
          %s531 = sshll.u32 %s517, 4
          %s532 = int_to_ptr.vmem [resolvable:$true] %s531
          %534 = dma.vmem_to_hbm [thread:$0]  %s532, 16, %s529, %s515
        $region36: #{tpu_custom_call.1} parent=27 // pred_fallthru
          _
        // Predicated region
        $region37: #{tpu_custom_call.1} parent=27 // pred_check
          %p535 = pneg %p126
        $region38: #{tpu_custom_call.1} parent=27 // pred_check_branch
          %537 = sbr.rel (%p535) target = $region40
        $region39: #{tpu_custom_call.1} parent=27 // pred_region
          %s539 = ssub.s32 16, 16
          %540 = vsyncadd %s519, %s539
          %s541 = smul.addr %s25, 16
          %s542 = scalar_lea.hbm %s3, %s541
          %s544 = sshll.u32 %s521, 4
          %s545 = int_to_ptr.vmem [resolvable:$true] %s544
          %547 = dma.vmem_to_hbm [thread:$0]  %s545, 16, %s542, %s519
        $region40: #{tpu_custom_call.1} parent=27 // pred_fallthru
          _
      $region28: #{tpu_custom_call.1} parent=5 // pred_fallthru
        _
      %p548 = scmp.le.s32.totalorder 2, %s16
      // Predicated region
      $region41: #{tpu_custom_call.1} parent=5 // pred_check
        %p549 = pneg %p548
      $region42: #{tpu_custom_call.1} parent=5 // pred_check_branch
        %551 = sbr.rel (%p549) target = $region44
      $region43: #{tpu_custom_call.1} parent=5 // pred_region
        %s552 = ssub.s32 %s16, 2
        // Predicated region
        $region45: #{tpu_custom_call.1} parent=43 // pred_check
          %p553 = pneg %p106
        $region46: #{tpu_custom_call.1} parent=43 // pred_check_branch
          %555 = sbr.rel (%p553) target = $region48
        $region47: #{tpu_custom_call.1} parent=43 // pred_region
          %s556 = sand.u32 %s91, 1
          %s557 = scalar_lea.sflag [#allocation3], %s556
          %s558 = sand.u32 %s91, 1
          %s559 = scalar_lea.vmem [#allocation2], %s558
          %560 = dma.done %s557, 16
        $region48: #{tpu_custom_call.1} parent=43 // pred_fallthru
          _
        // Predicated region
        $region49: #{tpu_custom_call.1} parent=43 // pred_check
          %p561 = pneg %p132
        $region50: #{tpu_custom_call.1} parent=43 // pred_check_branch
          %563 = sbr.rel (%p561) target = $region52
        $region51: #{tpu_custom_call.1} parent=43 // pred_region
          %s564 = sand.u32 %s117, 1
          %s565 = scalar_lea.sflag [#allocation5], %s564
          %s566 = sand.u32 %s117, 1
          %s567 = scalar_lea.vmem [#allocation4], %s566
          %568 = dma.done %s565, 16
        $region52: #{tpu_custom_call.1} parent=43 // pred_fallthru
          _
      $region44: #{tpu_custom_call.1} parent=5 // pred_fallthru
        _
    $region6: #{tpu_custom_call.1} parent=1 // loop_footer
      %s20 = sadd.s32 1, %s16
    $region7: #{tpu_custom_call.1} parent=1 // loop_footer_branch
      %15 = sbr.rel target = $region3
    $region8: #{tpu_custom_call.1} parent=1 // loop_exit
      _
    %569 = vsyncpa [#allocation3], 1
    %s570 = scalar_lea.sflag [#allocation3], 1
    %571 = vsyncpa %s570, 1
    %572 = vsyncpa [#allocation5], 1
    %s573 = scalar_lea.sflag [#allocation5], 1
    %574 = vsyncpa %s573, 1

</llo_original>
